<compile_context>
chip_gen: v7x
topology: tpu7x:2x2x1
jax: 0.10.0
libtpu: 0.0.40
codegen_flags: <defaults>
</compile_context>

<pallas_src>
import jax
import jax.numpy as jnp
from jax.experimental import pallas as pl
from jax.experimental.pallas import tpu as pltpu

_SQRT_HALF = 0.7071067811865476
_LN_EPS = 1e-5  # torch nn.LayerNorm default


def _gelu_erf(h):
    # torch nn.GELU() default (approximate='none') -> exact erf formulation.
    # TODO(synk): if VALU-bound on v6e, switch to tanh-approx GELU (EUP slot);
    # not done by default because it changes numerics vs torch's exact GELU.
    return 0.5 * h * (1.0 + jax.lax.erf(h * _SQRT_HALF))


def _layernorm_f32(x, g, b):
    x = x.astype(jnp.float32)
    mean = jnp.mean(x, axis=-1, keepdims=True)
    var = jnp.mean((x - mean) ** 2, axis=-1, keepdims=True)
    return (x - mean) * jax.lax.rsqrt(var + _LN_EPS) * g + b


# --------------------------------------------------------------------------- #
# Kernels
# --------------------------------------------------------------------------- #
def _mlp_kernel_resident(x_ref, g_ref, b_ref, w1_ref, b1_ref, w2_ref, b2_ref,
                         o_ref):
    """Weights resident in VMEM.  grid = (token tiles,).  No scratch."""
    xn = _layernorm_f32(x_ref[...], g_ref[...], b_ref[...]).astype(w1_ref.dtype)
    h = jnp.dot(xn, w1_ref[...], preferred_element_type=jnp.float32) + b1_ref[...]
    h = _gelu_erf(h)
    y = jnp.dot(h.astype(w2_ref.dtype), w2_ref[...],
                preferred_element_type=jnp.float32)
    # dropout(p=0.0) == identity
    o_ref[...] = (y + b2_ref[...]).astype(o_ref.dtype)


def _mlp_kernel_tiled(x_ref, g_ref, b_ref, w1_ref, b1_ref, w2_ref, b2_ref,
                      o_ref, xn_ref, acc_ref):
    """Hidden dim streamed in slabs.  grid = (token tiles, hidden tiles)."""
    k = pl.program_id(1)

    @pl.when(k == 0)
    def _init():
        xn_ref[...] = _layernorm_f32(x_ref[...], g_ref[...], b_ref[...])
        acc_ref[...] = jnp.zeros_like(acc_ref)

    xn = xn_ref[...].astype(w1_ref.dtype)
    h = jnp.dot(xn, w1_ref[...], preferred_element_type=jnp.float32) + b1_ref[...]
    h = _gelu_erf(h)
    acc_ref[...] += jnp.dot(h.astype(w2_ref.dtype), w2_ref[...],
                            preferred_element_type=jnp.float32)

    @pl.when(k == pl.num_programs(1) - 1)
    def _finalize():
        o_ref[...] = (acc_ref[...] + b2_ref[...]).astype(o_ref.dtype)


# --------------------------------------------------------------------------- #
# Wrapper
# --------------------------------------------------------------------------- #
def _round_up(x, m):
    return (x + m - 1) // m * m


def mlp_pallas(x, gamma, beta, w1, b1, w2, b2, *, tm=256, th=None,
               matmul_dtype=None):
    """x: (..., D). Returns (..., Dout). Matches MLP.forward (gated=False, p=0)."""
    orig_shape = x.shape
    D = orig_shape[-1]
    H = w1.shape[1]
    Dout = w2.shape[1]
    N = 1
    for s in orig_shape[:-1]:
        N *= s

    matmul_dtype = jnp.dtype(jnp.float32 if matmul_dtype is None else matmul_dtype)
    wbytes = matmul_dtype.itemsize
    xbytes = x.dtype.itemsize

    # ---- padded dims (lane-dense intermediates and output stores) ----------
    H_pad = _round_up(H, 128)
    Dout_pad = _round_up(Dout, 128)

    # ---- token tile ---------------------------------------------------------
    sub = 16 if x.dtype == jnp.bfloat16 else 8
    tm_eff = max(sub, min(tm, _round_up(N, sub)))
    tm_eff = _round_up(tm_eff, sub)
    n_pad = _round_up(N, tm_eff)

    # ---- path selection: resident weights vs hidden-dim streaming ----------
    weight_bytes = (D * H_pad + H_pad * Dout_pad) * wbytes
    resident_budget = 12 * 1024 * 1024   # keeps even 2x-buffered weights small
    use_resident = weight_bytes <= resident_budget

    if not use_resident:
        if th is None:
            th = H_pad
            slab_budget = 6 * 1024 * 1024
            for cand in (4096, 2048, 1024, 512, 256, 128):
                if H_pad % cand == 0 and (D + Dout_pad) * cand * wbytes <= slab_budget:
                    th = cand
                    break
        assert H_pad % th == 0, "hidden tile must divide (padded) hidden dim"
        hk = H_pad // th
    else:
        th = H_pad
        hk = 1

    # ---- operand prep -------------------------------------------------------
    x2 = x.reshape(N, D)
    if n_pad != N:
        x2 = jnp.pad(x2, ((0, n_pad - N), (0, 0)))
    g2 = gamma.reshape(1, D).astype(jnp.float32)
    be2 = beta.reshape(1, D).astype(jnp.float32)

    w1c = w1.astype(matmul_dtype)
    w2c = w2.astype(matmul_dtype)
    b1_2 = b1.reshape(1, H).astype(jnp.float32)
    b2_2 = b2.reshape(1, Dout).astype(jnp.float32)
    if H_pad != H:
        w1c = jnp.pad(w1c, ((0, 0), (0, H_pad - H)))
        b1_2 = jnp.pad(b1_2, ((0, 0), (0, H_pad - H)))
        w2c = jnp.pad(w2c, ((0, H_pad - H), (0, 0)))
    if Dout_pad != Dout:
        w2c = jnp.pad(w2c, ((0, 0), (0, Dout_pad - Dout)))
        b2_2 = jnp.pad(b2_2, ((0, 0), (0, Dout_pad - Dout)))

    # ---- VMEM budget / cost estimate ----------------------------------------
    if use_resident:
        vmem_need = (
            2 * tm_eff * (D + Dout_pad) * xbytes          # x / out tiles (2-buf)
            + 2 * weight_bytes                            # worst case 2-buf weights
            + (2 * D + H_pad + Dout_pad) * 4              # gamma/beta/biases
            + tm_eff * (D + H_pad + Dout_pad) * 4         # live intermediates
        )
    else:
        vmem_need = (
            2 * tm_eff * (D + Dout_pad) * xbytes
            + 2 * (D + Dout_pad) * th * wbytes            # streamed weight slabs
            + 2 * th * 4 + (2 * D + Dout_pad) * 4
            + tm_eff * (D + Dout_pad) * 4                 # xn + acc scratch
            + 2 * tm_eff * th * 4                         # h / gelu headroom
        )
    vmem_limit = max(32 * 1024 * 1024,
                     min(int(1.5 * vmem_need), 64 * 1024 * 1024))

    cost = pl.CostEstimate(
        flops=2 * N * D * H + 2 * N * H * Dout + 10 * N * D,
        transcendentals=N * H,
        bytes_accessed=N * (D + Dout) * xbytes
        + (D * H + H * Dout) * wbytes
        + (2 * D + H + Dout) * 4,
    )

    def build(single_buffer_consts):
        const_kw = (dict(pipeline_mode=pl.Buffered(1))
                    if single_buffer_consts and hasattr(pl, "Buffered") else {})
        if use_resident:
            grid = (n_pad // tm_eff,)
            in_specs = [
                pl.BlockSpec((tm_eff, D), lambda i: (i, 0)),                  # x
                pl.BlockSpec((1, D), lambda i: (0, 0), **const_kw),           # gamma
                pl.BlockSpec((1, D), lambda i: (0, 0), **const_kw),           # beta
                pl.BlockSpec((D, H_pad), lambda i: (0, 0), **const_kw),       # W1
                pl.BlockSpec((1, H_pad), lambda i: (0, 0), **const_kw),       # b1
                pl.BlockSpec((H_pad, Dout_pad), lambda i: (0, 0), **const_kw),  # W2
                pl.BlockSpec((1, Dout_pad), lambda i: (0, 0), **const_kw),    # b2
            ]
            out_specs = pl.BlockSpec((tm_eff, Dout_pad), lambda i: (i, 0))
            scratch_shapes = []
            kernel = _mlp_kernel_resident
            dims = ("parallel",)
        else:
            grid = (n_pad // tm_eff, hk)
            in_specs = [
                pl.BlockSpec((tm_eff, D), lambda i, k: (i, 0)),               # x
                pl.BlockSpec((1, D), lambda i, k: (0, 0), **const_kw),        # gamma
                pl.BlockSpec((1, D), lambda i, k: (0, 0), **const_kw),        # beta
                pl.BlockSpec((D, th), lambda i, k: (0, k)),                   # W1 slab
                pl.BlockSpec((1, th), lambda i, k: (0, k)),                   # b1 slab
                pl.BlockSpec((th, Dout_pad), lambda i, k: (k, 0)),            # W2 slab
                pl.BlockSpec((1, Dout_pad), lambda i, k: (0, 0), **const_kw),  # b2
            ]
            out_specs = pl.BlockSpec((tm_eff, Dout_pad), lambda i, k: (i, 0))
            scratch_shapes = [
                pltpu.VMEM((tm_eff, D), jnp.float32),        # cached LayerNorm
                pltpu.VMEM((tm_eff, Dout_pad), jnp.float32),  # proj2 accumulator
            ]
            kernel = _mlp_kernel_tiled
            dims = ("parallel", "arbitrary")

        return pl.pallas_call(
            kernel,
            out_shape=jax.ShapeDtypeStruct((n_pad, Dout_pad), x.dtype),
            grid_spec=pltpu.PrefetchScalarGridSpec(
                num_scalar_prefetch=0,
                grid=grid,
                in_specs=in_specs,
                out_specs=out_specs,
                scratch_shapes=scratch_shapes,
            ),
            compiler_params=pltpu.CompilerParams(
                dimension_semantics=dims,
                vmem_limit_bytes=vmem_limit,
            ),
            cost_estimate=cost,
        )

    args = (x2, g2, be2, w1c, b1_2, w2c, b2_2)
    try:
        out = build(True)(*args)
    except Exception:
        # Some jax versions reject single-buffered constant blocks; fall back
        # to default double-buffering (numerically identical).
        out = build(False)(*args)

    out = out[:N, :Dout]
    return out.reshape(*orig_shape[:-1], Dout)


# --------------------------------------------------------------------------- #
# Pure-JAX reference (matches the torch module)
# --------------------------------------------------------------------------- #
def mlp_reference(x, gamma, beta, w1, b1, w2, b2):
    xf = x.astype(jnp.float32)
    mean = jnp.mean(xf, axis=-1, keepdims=True)
    var = jnp.mean((xf - mean) ** 2, axis=-1, keepdims=True)
    xn = (xf - mean) * jax.lax.rsqrt(var + _LN_EPS) * gamma + beta
    h = xn @ w1 + b1
    h = 0.5 * h * (1.0 + jax.lax.erf(h / jnp.sqrt(2.0)))
    y = h @ w2 + b2
    return y.astype(x.dtype)


if __name__ == "__main__":
    # Module config: input_dim=32, expansion=4, gated=False, output_dim=None
    B, S, D = 2, 8, 32
    expansion = 4
    H = D * expansion          # 128
    Dout = D                   # default(output_dim, input_dim)

    key = jax.random.PRNGKey(0)
    kx, kg, kb, kw1, kb1, kw2, kb2 = jax.random.split(key, 7)

    x = jax.random.normal(kx, (B, S, D), dtype=jnp.float32)

    # nn.LayerNorm / nn.Linear shaped parameters (Linear weights kept (in, out)).
    gamma = jnp.ones((D,), jnp.float32) + 0.01 * jax.random.normal(kg, (D,), jnp.float32)
    beta = 0.01 * jax.random.normal(kb, (D,), jnp.float32)
    w1 = 0.02 * jax.random.normal(kw1, (D, H), jnp.float32)
    b1 = 0.02 * jax.random.normal(kb1, (H,), jnp.float32)
    w2 = 0.02 * jax.random.normal(kw2, (H, Dout), jnp.float32)
    b2 = 0.02 * jax.random.normal(kb2, (Dout,), jnp.float32)

    out = mlp_pallas(x, gamma, beta, w1, b1, w2, b2)
    out = jax.block_until_ready(out)

    ref = mlp_reference(x, gamma, beta, w1, b1, w2, b2)
    assert out.shape == (B, S, Dout)
    assert jnp.allclose(out, ref, atol=1e-5, rtol=1e-5), "mismatch vs reference"

    print("KERNEL_OK")
</pallas_src>

<mosaic_0001>
module attributes {stable_mosaic.version = 11 : i64} {
  func.func @_mlp_kernel_resident(%arg0: i32, %arg1: memref<16x32xf32, #tpu.memory_space<vmem>>, %arg2: memref<1x32xf32, #tpu.memory_space<vmem>>, %arg3: memref<1x32xf32, #tpu.memory_space<vmem>>, %arg4: memref<32x128xf32, #tpu.memory_space<vmem>>, %arg5: memref<1x128xf32, #tpu.memory_space<vmem>>, %arg6: memref<128x128xf32, #tpu.memory_space<vmem>>, %arg7: memref<1x128xf32, #tpu.memory_space<vmem>>, %arg8: memref<16x128xf32, #tpu.memory_space<vmem>>) attributes {dimension_semantics = [#tpu.dimension_semantics<parallel>], iteration_bounds = array<i64: 1>, scalar_prefetch = 0 : i64, scratch_operands = 0 : i64, tpu.core_type = #tpu.core_type<tc>, window_params = [{transform_indices = @transform_0, window_bounds = array<i64: 16, 32>}, {pipeline_mode = #tpu.pipeline_mode<synchronous>, transform_indices = @transform_1, window_bounds = array<i64: 1, 32>}, {pipeline_mode = #tpu.pipeline_mode<synchronous>, transform_indices = @transform_2, window_bounds = array<i64: 1, 32>}, {pipeline_mode = #tpu.pipeline_mode<synchronous>, transform_indices = @transform_3, window_bounds = array<i64: 32, 128>}, {pipeline_mode = #tpu.pipeline_mode<synchronous>, transform_indices = @transform_4, window_bounds = array<i64: 1, 128>}, {pipeline_mode = #tpu.pipeline_mode<synchronous>, transform_indices = @transform_5, window_bounds = array<i64: 128, 128>}, {pipeline_mode = #tpu.pipeline_mode<synchronous>, transform_indices = @transform_6, window_bounds = array<i64: 1, 128>}, {transform_indices = @transform_7, window_bounds = array<i64: 16, 128>}]} {
    %c0 = arith.constant 0 : index
    %c0_0 = arith.constant 0 : index
    %0 = vector.load %arg1[%c0, %c0_0] : memref<16x32xf32, #tpu.memory_space<vmem>>, vector<16x32xf32>
    %c0_1 = arith.constant 0 : index
    %c0_2 = arith.constant 0 : index
    %1 = vector.load %arg2[%c0_1, %c0_2] : memref<1x32xf32, #tpu.memory_space<vmem>>, vector<1x32xf32>
    %c0_3 = arith.constant 0 : index
    %c0_4 = arith.constant 0 : index
    %2 = vector.load %arg3[%c0_3, %c0_4] : memref<1x32xf32, #tpu.memory_space<vmem>>, vector<1x32xf32>
    %cst = arith.constant dense<0.000000e+00> : vector<16xf32>
    %3 = vector.multi_reduction <add>, %0, %cst [1] : vector<16x32xf32> to vector<16xf32>
    %4 = vector.shape_cast %3 : vector<16xf32> to vector<16x1xf32>
    %cst_5 = arith.constant 3.200000e+01 : f32
    %5 = vector.broadcast %cst_5 : f32 to vector<16x1xf32>
    %6 = arith.divf %4, %5 : vector<16x1xf32>
    %7 = vector.broadcast %6 : vector<16x1xf32> to vector<16x32xf32>
    %8 = arith.subf %0, %7 : vector<16x32xf32>
    %9 = arith.mulf %8, %8 : vector<16x32xf32>
    %cst_6 = arith.constant dense<0.000000e+00> : vector<16xf32>
    %10 = vector.multi_reduction <add>, %9, %cst_6 [1] : vector<16x32xf32> to vector<16xf32>
    %11 = vector.shape_cast %10 : vector<16xf32> to vector<16x1xf32>
    %cst_7 = arith.constant 3.200000e+01 : f32
    %12 = vector.broadcast %cst_7 : f32 to vector<16x1xf32>
    %13 = arith.divf %11, %12 : vector<16x1xf32>
    %14 = vector.broadcast %6 : vector<16x1xf32> to vector<16x32xf32>
    %15 = arith.subf %0, %14 : vector<16x32xf32>
    %cst_8 = arith.constant 9.99999974E-6 : f32
    %16 = vector.broadcast %cst_8 : f32 to vector<16x1xf32>
    %17 = arith.addf %13, %16 : vector<16x1xf32>
    %18 = math.rsqrt %17 : vector<16x1xf32>
    %19 = vector.broadcast %18 : vector<16x1xf32> to vector<16x32xf32>
    %20 = arith.mulf %15, %19 : vector<16x32xf32>
    %21 = vector.broadcast %1 : vector<1x32xf32> to vector<16x32xf32>
    %22 = arith.mulf %20, %21 : vector<16x32xf32>
    %23 = vector.broadcast %2 : vector<1x32xf32> to vector<16x32xf32>
    %24 = arith.addf %22, %23 : vector<16x32xf32>
    %c0_9 = arith.constant 0 : index
    %c0_10 = arith.constant 0 : index
    %25 = vector.load %arg4[%c0_9, %c0_10] : memref<32x128xf32, #tpu.memory_space<vmem>>, vector<32x128xf32>
    %cst_11 = arith.constant dense<0.000000e+00> : vector<16x128xf32>
    %26 = tpu.matmul %24, %25, %cst_11 {dimension_numbers = #tpu.dot_dimension_numbers<[1], [0], [0], [1], [0, 0, 1, 1], [], []>} : vector<16x32xf32>, vector<32x128xf32>, vector<16x128xf32> -> vector<16x128xf32>
    %c0_12 = arith.constant 0 : index
    %c0_13 = arith.constant 0 : index
    %27 = vector.load %arg5[%c0_12, %c0_13] : memref<1x128xf32, #tpu.memory_space<vmem>>, vector<1x128xf32>
    %28 = vector.broadcast %27 : vector<1x128xf32> to vector<16x128xf32>
    %29 = arith.addf %26, %28 : vector<16x128xf32>
    %cst_14 = arith.constant 5.000000e-01 : f32
    %30 = vector.broadcast %cst_14 : f32 to vector<16x128xf32>
    %31 = arith.mulf %30, %29 : vector<16x128xf32>
    %cst_15 = arith.constant 0.707106769 : f32
    %32 = vector.broadcast %cst_15 : f32 to vector<16x128xf32>
    %33 = arith.mulf %29, %32 : vector<16x128xf32>
    %34 = math.erf %33 : vector<16x128xf32>
    %cst_16 = arith.constant 1.000000e+00 : f32
    %35 = vector.broadcast %cst_16 : f32 to vector<16x128xf32>
    %36 = arith.addf %35, %34 : vector<16x128xf32>
    %37 = arith.mulf %31, %36 : vector<16x128xf32>
    %c0_17 = arith.constant 0 : index
    %c0_18 = arith.constant 0 : index
    %38 = vector.load %arg6[%c0_17, %c0_18] : memref<128x128xf32, #tpu.memory_space<vmem>>, vector<128x128xf32>
    %cst_19 = arith.constant dense<0.000000e+00> : vector<16x128xf32>
    %39 = tpu.matmul %37, %38, %cst_19 {dimension_numbers = #tpu.dot_dimension_numbers<[1], [0], [0], [1], [0, 0, 1, 1], [], []>} : vector<16x128xf32>, vector<128x128xf32>, vector<16x128xf32> -> vector<16x128xf32>
    %c0_20 = arith.constant 0 : index
    %c0_21 = arith.constant 0 : index
    %40 = vector.load %arg7[%c0_20, %c0_21] : memref<1x128xf32, #tpu.memory_space<vmem>>, vector<1x128xf32>
    %41 = vector.broadcast %40 : vector<1x128xf32> to vector<16x128xf32>
    %42 = arith.addf %39, %41 : vector<16x128xf32>
    %c0_22 = arith.constant 0 : index
    %c0_23 = arith.constant 0 : index
    %43 = vector.load %arg8[%c0_22, %c0_23] : memref<16x128xf32, #tpu.memory_space<vmem>>, vector<16x128xf32>
    tpu.vector_store %arg8[%c0_22, %c0_23], %42 {strides = array<i32>} : memref<16x128xf32, #tpu.memory_space<vmem>>, vector<16x128xf32>,
    return
  }
  func.func @transform_0(%arg0: i32) -> (i32, i32) {
    %c0_i32 = arith.constant 0 : i32
    %c0_i32_0 = arith.constant 0 : i32
    return %arg0, %c0_i32 : i32, i32
  }
  func.func @transform_1(%arg0: i32) -> (i32, i32) {
    %c0_i32 = arith.constant 0 : i32
    %c0_i32_0 = arith.constant 0 : i32
    %c0_i32_1 = arith.constant 0 : i32
    return %c0_i32, %c0_i32_0 : i32, i32
  }
  func.func @transform_2(%arg0: i32) -> (i32, i32) {
    %c0_i32 = arith.constant 0 : i32
    %c0_i32_0 = arith.constant 0 : i32
    %c0_i32_1 = arith.constant 0 : i32
    return %c0_i32, %c0_i32_0 : i32, i32
  }
  func.func @transform_3(%arg0: i32) -> (i32, i32) {
    %c0_i32 = arith.constant 0 : i32
    %c0_i32_0 = arith.constant 0 : i32
    %c0_i32_1 = arith.constant 0 : i32
    return %c0_i32, %c0_i32_0 : i32, i32
  }
  func.func @transform_4(%arg0: i32) -> (i32, i32) {
    %c0_i32 = arith.constant 0 : i32
    %c0_i32_0 = arith.constant 0 : i32
    %c0_i32_1 = arith.constant 0 : i32
    return %c0_i32, %c0_i32_0 : i32, i32
  }
  func.func @transform_5(%arg0: i32) -> (i32, i32) {
    %c0_i32 = arith.constant 0 : i32
    %c0_i32_0 = arith.constant 0 : i32
    %c0_i32_1 = arith.constant 0 : i32
    return %c0_i32, %c0_i32_0 : i32, i32
  }
  func.func @transform_6(%arg0: i32) -> (i32, i32) {
    %c0_i32 = arith.constant 0 : i32
    %c0_i32_0 = arith.constant 0 : i32
    %c0_i32_1 = arith.constant 0 : i32
    return %c0_i32, %c0_i32_0 : i32, i32
  }
  func.func @transform_7(%arg0: i32) -> (i32, i32) {
    %c0_i32 = arith.constant 0 : i32
    %c0_i32_0 = arith.constant 0 : i32
    return %arg0, %c0_i32 : i32, i32
  }
}

module attributes {stable_mosaic.version = 11 : i64} {
  func.func @_mlp_kernel_resident(%arg0: i32, %arg1: memref<16x32xf32, #tpu.memory_space<vmem>>, %arg2: memref<1x32xf32, #tpu.memory_space<vmem>>, %arg3: memref<1x32xf32, #tpu.memory_space<vmem>>, %arg4: memref<32x128xf32, #tpu.memory_space<vmem>>, %arg5: memref<1x128xf32, #tpu.memory_space<vmem>>, %arg6: memref<128x128xf32, #tpu.memory_space<vmem>>, %arg7: memref<1x128xf32, #tpu.memory_space<vmem>>, %arg8: memref<16x128xf32, #tpu.memory_space<vmem>>) attributes {dimension_semantics = [#tpu.dimension_semantics<parallel>], iteration_bounds = array<i64: 1>, scalar_prefetch = 0 : i64, scratch_operands = 0 : i64, tpu.core_type = #tpu.core_type<tc>, window_params = [{transform_indices = @transform_0, window_bounds = array<i64: 16, 32>}, {pipeline_mode = #tpu.pipeline_mode<synchronous>, transform_indices = @transform_1, window_bounds = array<i64: 1, 32>}, {pipeline_mode = #tpu.pipeline_mode<synchronous>, transform_indices = @transform_2, window_bounds = array<i64: 1, 32>}, {pipeline_mode = #tpu.pipeline_mode<synchronous>, transform_indices = @transform_3, window_bounds = array<i64: 32, 128>}, {pipeline_mode = #tpu.pipeline_mode<synchronous>, transform_indices = @transform_4, window_bounds = array<i64: 1, 128>}, {pipeline_mode = #tpu.pipeline_mode<synchronous>, transform_indices = @transform_5, window_bounds = array<i64: 128, 128>}, {pipeline_mode = #tpu.pipeline_mode<synchronous>, transform_indices = @transform_6, window_bounds = array<i64: 1, 128>}, {transform_indices = @transform_7, window_bounds = array<i64: 16, 128>}]} {
    %c0 = arith.constant 0 : index
    %c0_0 = arith.constant 0 : index
    %0 = vector.load %arg1[%c0, %c0_0] : memref<16x32xf32, #tpu.memory_space<vmem>>, vector<16x32xf32>
    %c0_1 = arith.constant 0 : index
    %c0_2 = arith.constant 0 : index
    %1 = vector.load %arg2[%c0_1, %c0_2] : memref<1x32xf32, #tpu.memory_space<vmem>>, vector<1x32xf32>
    %c0_3 = arith.constant 0 : index
    %c0_4 = arith.constant 0 : index
    %2 = vector.load %arg3[%c0_3, %c0_4] : memref<1x32xf32, #tpu.memory_space<vmem>>, vector<1x32xf32>
    %cst = arith.constant dense<0.000000e+00> : vector<16xf32>
    %3 = vector.multi_reduction <add>, %0, %cst [1] : vector<16x32xf32> to vector<16xf32>
    %4 = vector.shape_cast %3 : vector<16xf32> to vector<16x1xf32>
    %cst_5 = arith.constant 3.200000e+01 : f32
    %5 = vector.broadcast %cst_5 : f32 to vector<16x1xf32>
    %6 = arith.divf %4, %5 : vector<16x1xf32>
    %7 = vector.broadcast %6 : vector<16x1xf32> to vector<16x32xf32>
    %8 = arith.subf %0, %7 : vector<16x32xf32>
    %9 = arith.mulf %8, %8 : vector<16x32xf32>
    %cst_6 = arith.constant dense<0.000000e+00> : vector<16xf32>
    %10 = vector.multi_reduction <add>, %9, %cst_6 [1] : vector<16x32xf32> to vector<16xf32>
    %11 = vector.shape_cast %10 : vector<16xf32> to vector<16x1xf32>
    %cst_7 = arith.constant 3.200000e+01 : f32
    %12 = vector.broadcast %cst_7 : f32 to vector<16x1xf32>
    %13 = arith.divf %11, %12 : vector<16x1xf32>
    %14 = vector.broadcast %6 : vector<16x1xf32> to vector<16x32xf32>
    %15 = arith.subf %0, %14 : vector<16x32xf32>
    %cst_8 = arith.constant 9.99999974E-6 : f32
    %16 = vector.broadcast %cst_8 : f32 to vector<16x1xf32>
    %17 = arith.addf %13, %16 : vector<16x1xf32>
    %18 = math.rsqrt %17 : vector<16x1xf32>
    %19 = vector.broadcast %18 : vector<16x1xf32> to vector<16x32xf32>
    %20 = arith.mulf %15, %19 : vector<16x32xf32>
    %21 = vector.broadcast %1 : vector<1x32xf32> to vector<16x32xf32>
    %22 = arith.mulf %20, %21 : vector<16x32xf32>
    %23 = vector.broadcast %2 : vector<1x32xf32> to vector<16x32xf32>
    %24 = arith.addf %22, %23 : vector<16x32xf32>
    %c0_9 = arith.constant 0 : index
    %c0_10 = arith.constant 0 : index
    %25 = vector.load %arg4[%c0_9, %c0_10] : memref<32x128xf32, #tpu.memory_space<vmem>>, vector<32x128xf32>
    %cst_11 = arith.constant dense<0.000000e+00> : vector<16x128xf32>
    %26 = tpu.matmul %24, %25, %cst_11 {dimension_numbers = #tpu.dot_dimension_numbers<[1], [0], [0], [1], [0, 0, 1, 1], [], []>} : vector<16x32xf32>, vector<32x128xf32>, vector<16x128xf32> -> vector<16x128xf32>
    %c0_12 = arith.constant 0 : index
    %c0_13 = arith.constant 0 : index
    %27 = vector.load %arg5[%c0_12, %c0_13] : memref<1x128xf32, #tpu.memory_space<vmem>>, vector<1x128xf32>
    %28 = vector.broadcast %27 : vector<1x128xf32> to vector<16x128xf32>
    %29 = arith.addf %26, %28 : vector<16x128xf32>
    %cst_14 = arith.constant 5.000000e-01 : f32
    %30 = vector.broadcast %cst_14 : f32 to vector<16x128xf32>
    %31 = arith.mulf %30, %29 : vector<16x128xf32>
    %cst_15 = arith.constant 0.707106769 : f32
    %32 = vector.broadcast %cst_15 : f32 to vector<16x128xf32>
    %33 = arith.mulf %29, %32 : vector<16x128xf32>
    %34 = math.erf %33 : vector<16x128xf32>
    %cst_16 = arith.constant 1.000000e+00 : f32
    %35 = vector.broadcast %cst_16 : f32 to vector<16x128xf32>
    %36 = arith.addf %35, %34 : vector<16x128xf32>
    %37 = arith.mulf %31, %36 : vector<16x128xf32>
    %c0_17 = arith.constant 0 : index
    %c0_18 = arith.constant 0 : index
    %38 = vector.load %arg6[%c0_17, %c0_18] : memref<128x128xf32, #tpu.memory_space<vmem>>, vector<128x128xf32>
    %cst_19 = arith.constant dense<0.000000e+00> : vector<16x128xf32>
    %39 = tpu.matmul %37, %38, %cst_19 {dimension_numbers = #tpu.dot_dimension_numbers<[1], [0], [0], [1], [0, 0, 1, 1], [], []>} : vector<16x128xf32>, vector<128x128xf32>, vector<16x128xf32> -> vector<16x128xf32>
    %c0_20 = arith.constant 0 : index
    %c0_21 = arith.constant 0 : index
    %40 = vector.load %arg7[%c0_20, %c0_21] : memref<1x128xf32, #tpu.memory_space<vmem>>, vector<1x128xf32>
    %41 = vector.broadcast %40 : vector<1x128xf32> to vector<16x128xf32>
    %42 = arith.addf %39, %41 : vector<16x128xf32>
    %c0_22 = arith.constant 0 : index
    %c0_23 = arith.constant 0 : index
    %43 = vector.load %arg8[%c0_22, %c0_23] : memref<16x128xf32, #tpu.memory_space<vmem>>, vector<16x128xf32>
    tpu.vector_store %arg8[%c0_22, %c0_23], %42 {strides = array<i32>} : memref<16x128xf32, #tpu.memory_space<vmem>>, vector<16x128xf32>,
    return
  }
  func.func @transform_0(%arg0: i32) -> (i32, i32) {
    %c0_i32 = arith.constant 0 : i32
    %c0_i32_0 = arith.constant 0 : i32
    return %arg0, %c0_i32 : i32, i32
  }
  func.func @transform_1(%arg0: i32) -> (i32, i32) {
    %c0_i32 = arith.constant 0 : i32
    %c0_i32_0 = arith.constant 0 : i32
    %c0_i32_1 = arith.constant 0 : i32
    return %c0_i32, %c0_i32_0 : i32, i32
  }
  func.func @transform_2(%arg0: i32) -> (i32, i32) {
    %c0_i32 = arith.constant 0 : i32
    %c0_i32_0 = arith.constant 0 : i32
    %c0_i32_1 = arith.constant 0 : i32
    return %c0_i32, %c0_i32_0 : i32, i32
  }
  func.func @transform_3(%arg0: i32) -> (i32, i32) {
    %c0_i32 = arith.constant 0 : i32
    %c0_i32_0 = arith.constant 0 : i32
    %c0_i32_1 = arith.constant 0 : i32
    return %c0_i32, %c0_i32_0 : i32, i32
  }
  func.func @transform_4(%arg0: i32) -> (i32, i32) {
    %c0_i32 = arith.constant 0 : i32
    %c0_i32_0 = arith.constant 0 : i32
    %c0_i32_1 = arith.constant 0 : i32
    return %c0_i32, %c0_i32_0 : i32, i32
  }
  func.func @transform_5(%arg0: i32) -> (i32, i32) {
    %c0_i32 = arith.constant 0 : i32
    %c0_i32_0 = arith.constant 0 : i32
    %c0_i32_1 = arith.constant 0 : i32
    return %c0_i32, %c0_i32_0 : i32, i32
  }
  func.func @transform_6(%arg0: i32) -> (i32, i32) {
    %c0_i32 = arith.constant 0 : i32
    %c0_i32_0 = arith.constant 0 : i32
    %c0_i32_1 = arith.constant 0 : i32
    return %c0_i32, %c0_i32_0 : i32, i32
  }
  func.func @transform_7(%arg0: i32) -> (i32, i32) {
    %c0_i32 = arith.constant 0 : i32
    %c0_i32_0 = arith.constant 0 : i32
    return %arg0, %c0_i32 : i32, i32
  }
}

</mosaic_0001>

<llo_original>
// kernel: tpu_custom_call.1
$region0: #{tpu_custom_call.1}
  #allocation0 [shape = 'u32[]', space=smem, size = 0x4, offset = 0x4, fixed_abs, tag = 'smem constant byte address 0x4 - core index']
  #allocation1 [shape = 'u32[144,128]{1,0:T(1,128)}', space=vmem, size = 0x12000, scoped, tag = 'internal scratch']
  %s0 = inlined_call_operand.hbm [shape: f32[16,32], index: 0, kind: input, shape index: {}]
  %s1 = inlined_call_operand.vmem [shape: f32[1,32], index: 1, kind: input, shape index: {}]
  %s2 = inlined_call_operand.vmem [shape: f32[1,32], index: 2, kind: input, shape index: {}]
  %s3 = inlined_call_operand.hbm [shape: f32[32,128], index: 3, kind: input, shape index: {}]
  %s4 = inlined_call_operand.vmem [shape: f32[1,128], index: 4, kind: input, shape index: {}]
  %s5 = inlined_call_operand.hbm [shape: f32[128,128], index: 5, kind: input, shape index: {}]
  %s6 = inlined_call_operand.vmem [shape: f32[1,128], index: 6, kind: input, shape index: {}]
  %s7 = inlined_call_operand.hbm [shape: f32[16,128], index: 7, kind: output, shape index: {}]
  %s8 = sld [smem:[#allocation0]]
  $region50: #{tpu_custom_call.1} parent=0
    _
  %s10 = ssub.s32 1, %s8
  %s11 = scalar_select 0, %s10, %s8
  $region1: #{tpu_custom_call.1} parent=0
    #allocation2 [shape = 'u8[8192]{0}', space=vmem, size = 0x2000, scoped, tag = 'input window, operand 0, single buffered']
    #allocation3 [shape = 's32[1]{0}', space=sflag, size = 0x4, scoped, tag = 'scoped memory for tpu_custom_call.1']
    #allocation4 [shape = 's32[1]{0}', space=sflag, size = 0x4, scoped, tag = 'scoped memory for tpu_custom_call.1']
    #allocation5 [shape = 'u8[16384]{0}', space=vmem, size = 0x4000, scoped, tag = 'input window, operand 3, single buffered']
    #allocation6 [shape = 's32[1]{0}', space=sflag, size = 0x4, scoped, tag = 'scoped memory for tpu_custom_call.1']
    #allocation7 [shape = 'u8[65536]{0}', space=vmem, size = 0x10000, scoped, tag = 'input window, operand 5, single buffered']
    #allocation8 [shape = 'u8[8192]{0}', space=vmem, size = 0x2000, scoped, tag = 'output window, operand 0, single buffered']
    %12 = vsyncpa [#allocation3], 0
    %13 = vsyncpa [#allocation6], 0
    %14 = vsyncpa [#allocation4], 0
    // Predicated region
    $region2: #{tpu_custom_call.1} parent=1 // pred_check
      _
    $region3: #{tpu_custom_call.1} parent=1 // pred_check_branch
      %16 = sbr.rel (0) target = $region5
    $region4: #{tpu_custom_call.1} parent=1 // pred_region
      %s18 = ssub.s32 256, 256
      %19 = vsyncadd [#allocation3], %s18
      %s20 = sshll.u32 [#allocation2], 4
      %s21 = int_to_ptr.vmem [resolvable:$true] %s20
      %26 = dma.hbm_to_vmem [thread:$0]  %s0, 256, %s21, [#allocation3], 128, 128, 8
    $region5: #{tpu_custom_call.1} parent=1 // pred_fallthru
      _
    // Predicated region
    $region6: #{tpu_custom_call.1} parent=1 // pred_check
      _
    $region7: #{tpu_custom_call.1} parent=1 // pred_check_branch
      %28 = sbr.rel (0) target = $region9
    $region8: #{tpu_custom_call.1} parent=1 // pred_region
      _
    $region9: #{tpu_custom_call.1} parent=1 // pred_fallthru
      _
    // Predicated region
    $region10: #{tpu_custom_call.1} parent=1 // pred_check
      _
    $region11: #{tpu_custom_call.1} parent=1 // pred_check_branch
      %30 = sbr.rel (0) target = $region13
    $region12: #{tpu_custom_call.1} parent=1 // pred_region
      _
    $region13: #{tpu_custom_call.1} parent=1 // pred_fallthru
      _
    // Predicated region
    $region14: #{tpu_custom_call.1} parent=1 // pred_check
      _
    $region15: #{tpu_custom_call.1} parent=1 // pred_check_branch
      %32 = sbr.rel (0) target = $region17
    $region16: #{tpu_custom_call.1} parent=1 // pred_region
      %s34 = ssub.s32 512, 512
      %35 = vsyncadd [#allocation6], %s34
      %s36 = sshll.u32 [#allocation5], 4
      %s37 = int_to_ptr.vmem [resolvable:$true] %s36
      %42 = dma.hbm_to_vmem [thread:$0]  %s3, 512, %s37, [#allocation6], 128, 128, 8
    $region17: #{tpu_custom_call.1} parent=1 // pred_fallthru
      _
    // Predicated region
    $region18: #{tpu_custom_call.1} parent=1 // pred_check
      _
    $region19: #{tpu_custom_call.1} parent=1 // pred_check_branch
      %44 = sbr.rel (0) target = $region21
    $region20: #{tpu_custom_call.1} parent=1 // pred_region
      _
    $region21: #{tpu_custom_call.1} parent=1 // pred_fallthru
      _
    // Predicated region
    $region22: #{tpu_custom_call.1} parent=1 // pred_check
      _
    $region23: #{tpu_custom_call.1} parent=1 // pred_check_branch
      %46 = sbr.rel (0) target = $region25
    $region24: #{tpu_custom_call.1} parent=1 // pred_region
      %s48 = ssub.s32 2048, 2048
      %49 = vsyncadd [#allocation6], %s48
      %s50 = sshll.u32 [#allocation7], 4
      %s51 = int_to_ptr.vmem [resolvable:$true] %s50
      %56 = dma.hbm_to_vmem [thread:$0]  %s5, 2048, %s51, [#allocation6], 128, 128, 8
    $region25: #{tpu_custom_call.1} parent=1 // pred_fallthru
      _
    // Predicated region
    $region26: #{tpu_custom_call.1} parent=1 // pred_check
      _
    $region27: #{tpu_custom_call.1} parent=1 // pred_check_branch
      %58 = sbr.rel (0) target = $region29
    $region28: #{tpu_custom_call.1} parent=1 // pred_region
      _
    $region29: #{tpu_custom_call.1} parent=1 // pred_fallthru
      _
    // Predicated region
    $region30: #{tpu_custom_call.1} parent=1 // pred_check
      _
    $region31: #{tpu_custom_call.1} parent=1 // pred_check_branch
      %60 = sbr.rel (0) target = $region33
    $region32: #{tpu_custom_call.1} parent=1 // pred_region
      %61 = dma.done [#allocation3], 256
    $region33: #{tpu_custom_call.1} parent=1 // pred_fallthru
      _
    // Predicated region
    $region34: #{tpu_custom_call.1} parent=1 // pred_check
      _
    $region35: #{tpu_custom_call.1} parent=1 // pred_check_branch
      %63 = sbr.rel (0) target = $region37
    $region36: #{tpu_custom_call.1} parent=1 // pred_region
      %64 = dma.done [#allocation6], 512
    $region37: #{tpu_custom_call.1} parent=1 // pred_fallthru
      _
    // Predicated region
    $region38: #{tpu_custom_call.1} parent=1 // pred_check
      _
    $region39: #{tpu_custom_call.1} parent=1 // pred_check_branch
      %66 = sbr.rel (0) target = $region41
    $region40: #{tpu_custom_call.1} parent=1 // pred_region
      %67 = dma.done [#allocation6], 2048
    $region41: #{tpu_custom_call.1} parent=1 // pred_fallthru
      _
    %v68 = vld [vmem:[#allocation2] sm:$0xff]
    %v69 = vld [vmem:[#allocation2 + $0x8] sm:$0xff]
    %v70 = vld [vmem:[%s1] sm:$0x1]
    %v71 = vld [vmem:[%s2] sm:$0x1]
    %vm72 = vcmask 261120
    %v73 = vsel %vm72, %v68, 0.0
    %74 = vadd.xlane.f32.xlu0 %v73
    %v75 = vpop.xlane.xlu0 %74
    %v76 = vsel %vm72, %v69, 0.0
    %77 = vadd.xlane.f32.xlu0 %v76
    %v78 = vpop.xlane.xlu0 %77
    %v79 = vrcp.pop 32.0
    %v80 = vmul.f32 %v75, %v79
    %v81 = vmul.f32 %v78, %v79
    %v82 = vsub.f32 %v68, %v80
    %v83 = vsub.f32 %v69, %v81
    %v84 = vmul.f32 %v82, %v82
    %v85 = vmul.f32 %v83, %v83
    %v86 = vsel %vm72, %v84, 0.0
    %87 = vadd.xlane.f32.xlu0 %v86
    %v88 = vpop.xlane.xlu0 %87
    %v89 = vsel %vm72, %v85, 0.0
    %90 = vadd.xlane.f32.xlu0 %v89
    %v91 = vpop.xlane.xlu0 %90
    %v92 = vmul.f32 %v88, %v79
    %v93 = vmul.f32 %v91, %v79
    %v94 = vadd.f32 %v92, 1e-05
    %v95 = vadd.f32 %v93, 1e-05
    %v96 = vrsqrt.pop %v94
    %v97 = vrsqrt.pop %v95
    %v98 = vmul.f32 %v82, %v96
    %v99 = vmul.f32 %v83, %v97
    %v101 = vlaneseq
    %v102 = vshrl.u32 %v101, 7
    %v103 = vsub.s32 0, %v102
    %v104 = vrot.slane %v70, %v103
    %v106 = vmul.f32 %v98, %v104
    %v107 = vmul.f32 %v99, %v104
    %v109 = vlaneseq
    %v110 = vshrl.u32 %v109, 7
    %v111 = vsub.s32 0, %v110
    %v112 = vrot.slane %v71, %v111
    %v114 = vadd.f32 %v106, %v112
    %v115 = vadd.f32 %v107, %v112
    %v116 = vld [vmem:[#allocation5] sm:$0xff]
    %v117 = vld [vmem:[#allocation5 + $0x8] sm:$0xff]
    %v118 = vld [vmem:[#allocation5 + $0x10] sm:$0xff]
    %v119 = vld [vmem:[#allocation5 + $0x18] sm:$0xff]
    %v120 = vld [vmem:[%s4] sm:$0x1]
    %v122 = vlaneseq
    %v123 = vshrl.u32 %v122, 7
    %v124 = vsub.s32 0, %v123
    %v125 = vrot.slane %v120, %v124
    %v128 = vsel %vm72, %v114, 0
    %v131 = vsel %vm72, %v115, 0
    %133 = vmatprep.subr.mxu0 0.0
    %134 = vmatpush1.msra.mxu0 %v116
    %135 = vmatprep.subr.mxu0 0.0
    %136 = vmatpush1.msra.mxu0 %v117
    %137 = vmatprep.subr.mxu0 0.0
    %138 = vmatpush1.msra.mxu0 %v118
    %139 = vmatprep.subr.mxu0 0.0
    %140 = vmatpush1.msra.mxu0 %v119
    %141 = vmatprep.subr.mxu0 0.0
    %142 = vmatpush1.msra.mxu0 0.0
    %143 = vmatprep.subr.mxu0 0.0
    %144 = vmatpush1.msra.mxu0 0.0
    %145 = vmatprep.subr.mxu0 0.0
    %146 = vmatpush1.msra.mxu0 0.0
    %147 = vmatprep.subr.mxu0 0.0
    %148 = vmatpush1.msra.mxu0 0.0
    %149 = vmatprep.subr.mxu0 0.0
    %150 = vmatpush1.msra.mxu0 0.0
    %151 = vmatprep.subr.mxu0 0.0
    %152 = vmatpush1.msra.mxu0 0.0
    %153 = vmatprep.subr.mxu0 0.0
    %154 = vmatpush1.msra.mxu0 0.0
    %155 = vmatprep.subr.mxu0 0.0
    %156 = vmatpush1.msra.mxu0 0.0
    %157 = vmatprep.subr.mxu0 0.0
    %158 = vmatpush1.msra.mxu0 0.0
    %159 = vmatprep.subr.mxu0 0.0
    %160 = vmatpush1.msra.mxu0 0.0
    %161 = vmatprep.subr.mxu0 0.0
    %162 = vmatpush1.msra.mxu0 0.0
    %163 = vmatprep.subr.mxu0 0.0
    %164 = vmatpush1.msra.mxu0 0.0
    %165 = vmatprep.subr.mxu0 0.0
    %166 = vmatpush1.msra.mxu0 0.0
    %167 = vmatprep.subr.mxu0 0.0
    %168 = vmatpush1.msra.mxu0 0.0
    %169 = vmatprep.subr.mxu0 0.0
    %170 = vmatpush1.msra.mxu0 0.0
    %171 = vmatprep.subr.mxu0 0.0
    %172 = vmatpush1.msra.mxu0 0.0
    %173 = vmatprep.subr.mxu0 0.0
    %174 = vmatpush1.msra.mxu0 0.0
    %175 = vmatprep.subr.mxu0 0.0
    %176 = vmatpush1.msra.mxu0 0.0
    %177 = vmatprep.subr.mxu0 0.0
    %178 = vmatpush1.msra.mxu0 0.0
    %179 = vmatprep.subr.mxu0 0.0
    %180 = vmatpush1.msra.mxu0 0.0
    %181 = vmatprep.subr.mxu0 0.0
    %182 = vmatpush1.msra.mxu0 0.0
    %183 = vmatprep.subr.mxu0 0.0
    %184 = vmatpush1.msra.mxu0 0.0
    %185 = vmatprep.subr.mxu0 0.0
    %186 = vmatpush1.msra.mxu0 0.0
    %187 = vmatprep.subr.mxu0 0.0
    %188 = vmatpush1.msra.mxu0 0.0
    %189 = vmatprep.subr.mxu0 0.0
    %190 = vmatpush1.msra.mxu0 0.0
    %191 = vmatprep.subr.mxu0 0.0
    %192 = vmatpush1.msra.mxu0 0.0
    %193 = vmatprep.subr.mxu0 0.0
    %194 = vmatpush1.msra.mxu0 0.0
    %195 = vmatprep.subr.mxu0 0.0
    %196 = vmatpush1.msra.mxu0 0.0
    %197 = vmatprep.mubr.f32.mxu0 0.0
    %198 = vmatmul.mubr.f32.gmra.mrb[0].mxu0 %v128
    %v199 = vpop.f32.mrb[0].mxu0
    %v200 = vadd.f32 %v125, %v199
    %v201 = vpop.f32.mrb[0].mxu0
    %202 = vmatprep.mubr.f32.mxu0 0.0
    %203 = vmatmul.mubr.f32.gmra.mrb[0].mxu0 %v131
    %v204 = vpop.f32.mrb[0].mxu0
    %v205 = vadd.f32 %v125, %v204
    %v206 = vpop.f32.mrb[0].mxu0
    %207 = vdwg.mxu0
    %v208 = vmul.f32 %v200, 0.5
    %v209 = vmul.f32 %v205, 0.5
    %v210 = vmul.f32 %v200, 0.70710677
    %v211 = vmul.f32 %v205, 0.70710677
    %v212 = verf.f32.pop %v210
    %v213 = verf.f32.pop %v211
    %v214 = vadd.f32 %v212, 1.0
    %v215 = vadd.f32 %v213, 1.0
    %v216 = vmul.f32 %v208, %v214
    %v217 = vmul.f32 %v209, %v215
    %v218 = vld [vmem:[#allocation7] sm:$0xff]
    %v219 = vld [vmem:[#allocation7 + $0x8] sm:$0xff]
    %v220 = vld [vmem:[#allocation7 + $0x10] sm:$0xff]
    %v221 = vld [vmem:[#allocation7 + $0x18] sm:$0xff]
    %v222 = vld [vmem:[#allocation7 + $0x20] sm:$0xff]
    %v223 = vld [vmem:[#allocation7 + $0x28] sm:$0xff]
    %v224 = vld [vmem:[#allocation7 + $0x30] sm:$0xff]
    %v225 = vld [vmem:[#allocation7 + $0x38] sm:$0xff]
    %v226 = vld [vmem:[#allocation7 + $0x40] sm:$0xff]
    %v227 = vld [vmem:[#allocation7 + $0x48] sm:$0xff]
    %v228 = vld [vmem:[#allocation7 + $0x50] sm:$0xff]
    %v229 = vld [vmem:[#allocation7 + $0x58] sm:$0xff]
    %v230 = vld [vmem:[#allocation7 + $0x60] sm:$0xff]
    %v231 = vld [vmem:[#allocation7 + $0x68] sm:$0xff]
    %v232 = vld [vmem:[#allocation7 + $0x70] sm:$0xff]
    %v233 = vld [vmem:[#allocation7 + $0x78] sm:$0xff]
    %v234 = vld [vmem:[%s6] sm:$0x1]
    %v236 = vlaneseq
    %v237 = vshrl.u32 %v236, 7
    %v238 = vsub.s32 0, %v237
    %v239 = vrot.slane %v234, %v238
    %241 = vmatprep.subr.mxu0 0.0
    %242 = vmatpush1.msra.mxu0 %v218
    %243 = vmatprep.subr.mxu0 0.0
    %244 = vmatpush1.msra.mxu0 %v219
    %245 = vmatprep.subr.mxu0 0.0
    %246 = vmatpush1.msra.mxu0 %v220
    %247 = vmatprep.subr.mxu0 0.0
    %248 = vmatpush1.msra.mxu0 %v221
    %249 = vmatprep.subr.mxu0 0.0
    %250 = vmatpush1.msra.mxu0 %v222
    %251 = vmatprep.subr.mxu0 0.0
    %252 = vmatpush1.msra.mxu0 %v223
    %253 = vmatprep.subr.mxu0 0.0
    %254 = vmatpush1.msra.mxu0 %v224
    %255 = vmatprep.subr.mxu0 0.0
    %256 = vmatpush1.msra.mxu0 %v225
    %257 = vmatprep.subr.mxu0 0.0
    %258 = vmatpush1.msra.mxu0 %v226
    %259 = vmatprep.subr.mxu0 0.0
    %260 = vmatpush1.msra.mxu0 %v227
    %261 = vmatprep.subr.mxu0 0.0
    %262 = vmatpush1.msra.mxu0 %v228
    %263 = vmatprep.subr.mxu0 0.0
    %264 = vmatpush1.msra.mxu0 %v229
    %265 = vmatprep.subr.mxu0 0.0
    %266 = vmatpush1.msra.mxu0 %v230
    %267 = vmatprep.subr.mxu0 0.0
    %268 = vmatpush1.msra.mxu0 %v231
    %269 = vmatprep.subr.mxu0 0.0
    %270 = vmatpush1.msra.mxu0 %v232
    %271 = vmatprep.subr.mxu0 0.0
    %272 = vmatpush1.msra.mxu0 %v233
    %273 = vmatprep.subr.mxu0 0.0
    %274 = vmatpush1.msra.mxu0 0.0
    %275 = vmatprep.subr.mxu0 0.0
    %276 = vmatpush1.msra.mxu0 0.0
    %277 = vmatprep.subr.mxu0 0.0
    %278 = vmatpush1.msra.mxu0 0.0
    %279 = vmatprep.subr.mxu0 0.0
    %280 = vmatpush1.msra.mxu0 0.0
    %281 = vmatprep.subr.mxu0 0.0
    %282 = vmatpush1.msra.mxu0 0.0
    %283 = vmatprep.subr.mxu0 0.0
    %284 = vmatpush1.msra.mxu0 0.0
    %285 = vmatprep.subr.mxu0 0.0
    %286 = vmatpush1.msra.mxu0 0.0
    %287 = vmatprep.subr.mxu0 0.0
    %288 = vmatpush1.msra.mxu0 0.0
    %289 = vmatprep.subr.mxu0 0.0
    %290 = vmatpush1.msra.mxu0 0.0
    %291 = vmatprep.subr.mxu0 0.0
    %292 = vmatpush1.msra.mxu0 0.0
    %293 = vmatprep.subr.mxu0 0.0
    %294 = vmatpush1.msra.mxu0 0.0
    %295 = vmatprep.subr.mxu0 0.0
    %296 = vmatpush1.msra.mxu0 0.0
    %297 = vmatprep.subr.mxu0 0.0
    %298 = vmatpush1.msra.mxu0 0.0
    %299 = vmatprep.subr.mxu0 0.0
    %300 = vmatpush1.msra.mxu0 0.0
    %301 = vmatprep.subr.mxu0 0.0
    %302 = vmatpush1.msra.mxu0 0.0
    %303 = vmatprep.subr.mxu0 0.0
    %304 = vmatpush1.msra.mxu0 0.0
    %305 = vmatprep.mubr.f32.mxu0 0.0
    %306 = vmatmul.mubr.f32.gmra.mrb[0].mxu0 %v216
    %v307 = vpop.f32.mrb[0].mxu0
    %v308 = vadd.f32 %v239, %v307
    %v309 = vpop.f32.mrb[0].mxu0
    %310 = vmatprep.mubr.f32.mxu0 0.0
    %311 = vmatmul.mubr.f32.gmra.mrb[0].mxu0 %v217
    %v312 = vpop.f32.mrb[0].mxu0
    %v313 = vadd.f32 %v239, %v312
    %v314 = vpop.f32.mrb[0].mxu0
    %315 = vdwg.mxu0
    %316 = vst [vmem:[#allocation8] sm:$0xff] %v308
    %317 = vst [vmem:[#allocation8 + $0x8] sm:$0xff] %v313
    // Predicated region
    $region42: #{tpu_custom_call.1} parent=1 // pred_check
      _
    $region43: #{tpu_custom_call.1} parent=1 // pred_check_branch
      %319 = sbr.rel (0) target = $region45
    $region44: #{tpu_custom_call.1} parent=1 // pred_region
      %s321 = ssub.s32 256, 256
      %322 = vsyncadd [#allocation4], %s321
      %s323 = sshll.u32 [#allocation8], 4
      %s324 = int_to_ptr.vmem [resolvable:$true] %s323
      %329 = dma.vmem_to_hbm [thread:$0]  %s324, 256, %s7, [#allocation4], 128, 128, 8
    $region45: #{tpu_custom_call.1} parent=1 // pred_fallthru
      _
    // Predicated region
    $region46: #{tpu_custom_call.1} parent=1 // pred_check
      _
    $region47: #{tpu_custom_call.1} parent=1 // pred_check_branch
      %331 = sbr.rel (0) target = $region49
    $region48: #{tpu_custom_call.1} parent=1 // pred_region
      %332 = dma.done [#allocation4], 256
    $region49: #{tpu_custom_call.1} parent=1 // pred_fallthru
      _
    %333 = vsyncpa [#allocation3], 1
    %334 = vsyncpa [#allocation6], 1
    %335 = vsyncpa [#allocation4], 1

// kernel: tpu_custom_call.1
$region0: #{tpu_custom_call.1}
  #allocation0 [shape = 'u32[]', space=smem, size = 0x4, offset = 0x4, fixed_abs, tag = 'smem constant byte address 0x4 - core index']
  #allocation1 [shape = 'u32[144,128]{1,0:T(1,128)}', space=vmem, size = 0x12000, scoped, tag = 'internal scratch']
  %s0 = inlined_call_operand.hbm [shape: f32[16,32], index: 0, kind: input, shape index: {}]
  %s1 = inlined_call_operand.vmem [shape: f32[1,32], index: 1, kind: input, shape index: {}]
  %s2 = inlined_call_operand.vmem [shape: f32[1,32], index: 2, kind: input, shape index: {}]
  %s3 = inlined_call_operand.hbm [shape: f32[32,128], index: 3, kind: input, shape index: {}]
  %s4 = inlined_call_operand.vmem [shape: f32[1,128], index: 4, kind: input, shape index: {}]
  %s5 = inlined_call_operand.hbm [shape: f32[128,128], index: 5, kind: input, shape index: {}]
  %s6 = inlined_call_operand.vmem [shape: f32[1,128], index: 6, kind: input, shape index: {}]
  %s7 = inlined_call_operand.hbm [shape: f32[16,128], index: 7, kind: output, shape index: {}]
  %s8 = sld [smem:[#allocation0]]
  $region50: #{tpu_custom_call.1} parent=0
    _
  %s10 = ssub.s32 1, %s8
  %s11 = scalar_select 0, %s10, %s8
  $region1: #{tpu_custom_call.1} parent=0
    #allocation2 [shape = 'u8[8192]{0}', space=vmem, size = 0x2000, scoped, tag = 'input window, operand 0, single buffered']
    #allocation3 [shape = 's32[1]{0}', space=sflag, size = 0x4, scoped, tag = 'scoped memory for tpu_custom_call.1']
    #allocation4 [shape = 's32[1]{0}', space=sflag, size = 0x4, scoped, tag = 'scoped memory for tpu_custom_call.1']
    #allocation5 [shape = 'u8[16384]{0}', space=vmem, size = 0x4000, scoped, tag = 'input window, operand 3, single buffered']
    #allocation6 [shape = 's32[1]{0}', space=sflag, size = 0x4, scoped, tag = 'scoped memory for tpu_custom_call.1']
    #allocation7 [shape = 'u8[65536]{0}', space=vmem, size = 0x10000, scoped, tag = 'input window, operand 5, single buffered']
    #allocation8 [shape = 'u8[8192]{0}', space=vmem, size = 0x2000, scoped, tag = 'output window, operand 0, single buffered']
    %12 = vsyncpa [#allocation3], 0
    %13 = vsyncpa [#allocation6], 0
    %14 = vsyncpa [#allocation4], 0
    // Predicated region
    $region2: #{tpu_custom_call.1} parent=1 // pred_check
      _
    $region3: #{tpu_custom_call.1} parent=1 // pred_check_branch
      %16 = sbr.rel (0) target = $region5
    $region4: #{tpu_custom_call.1} parent=1 // pred_region
      %s18 = ssub.s32 256, 256
      %19 = vsyncadd [#allocation3], %s18
      %s20 = sshll.u32 [#allocation2], 4
      %s21 = int_to_ptr.vmem [resolvable:$true] %s20
      %26 = dma.hbm_to_vmem [thread:$0]  %s0, 256, %s21, [#allocation3], 128, 128, 8
    $region5: #{tpu_custom_call.1} parent=1 // pred_fallthru
      _
    // Predicated region
    $region6: #{tpu_custom_call.1} parent=1 // pred_check
      _
    $region7: #{tpu_custom_call.1} parent=1 // pred_check_branch
      %28 = sbr.rel (0) target = $region9
    $region8: #{tpu_custom_call.1} parent=1 // pred_region
      _
    $region9: #{tpu_custom_call.1} parent=1 // pred_fallthru
      _
    // Predicated region
    $region10: #{tpu_custom_call.1} parent=1 // pred_check
      _
    $region11: #{tpu_custom_call.1} parent=1 // pred_check_branch
      %30 = sbr.rel (0) target = $region13
    $region12: #{tpu_custom_call.1} parent=1 // pred_region
      _
    $region13: #{tpu_custom_call.1} parent=1 // pred_fallthru
      _
    // Predicated region
    $region14: #{tpu_custom_call.1} parent=1 // pred_check
      _
    $region15: #{tpu_custom_call.1} parent=1 // pred_check_branch
      %32 = sbr.rel (0) target = $region17
    $region16: #{tpu_custom_call.1} parent=1 // pred_region
      %s34 = ssub.s32 512, 512
      %35 = vsyncadd [#allocation6], %s34
      %s36 = sshll.u32 [#allocation5], 4
      %s37 = int_to_ptr.vmem [resolvable:$true] %s36
      %42 = dma.hbm_to_vmem [thread:$0]  %s3, 512, %s37, [#allocation6], 128, 128, 8
    $region17: #{tpu_custom_call.1} parent=1 // pred_fallthru
      _
    // Predicated region
    $region18: #{tpu_custom_call.1} parent=1 // pred_check
      _
    $region19: #{tpu_custom_call.1} parent=1 // pred_check_branch
      %44 = sbr.rel (0) target = $region21
    $region20: #{tpu_custom_call.1} parent=1 // pred_region
      _
    $region21: #{tpu_custom_call.1} parent=1 // pred_fallthru
      _
    // Predicated region
    $region22: #{tpu_custom_call.1} parent=1 // pred_check
      _
    $region23: #{tpu_custom_call.1} parent=1 // pred_check_branch
      %46 = sbr.rel (0) target = $region25
    $region24: #{tpu_custom_call.1} parent=1 // pred_region
      %s48 = ssub.s32 2048, 2048
      %49 = vsyncadd [#allocation6], %s48
      %s50 = sshll.u32 [#allocation7], 4
      %s51 = int_to_ptr.vmem [resolvable:$true] %s50
      %56 = dma.hbm_to_vmem [thread:$0]  %s5, 2048, %s51, [#allocation6], 128, 128, 8
    $region25: #{tpu_custom_call.1} parent=1 // pred_fallthru
      _
    // Predicated region
    $region26: #{tpu_custom_call.1} parent=1 // pred_check
      _
    $region27: #{tpu_custom_call.1} parent=1 // pred_check_branch
      %58 = sbr.rel (0) target = $region29
    $region28: #{tpu_custom_call.1} parent=1 // pred_region
      _
    $region29: #{tpu_custom_call.1} parent=1 // pred_fallthru
      _
    // Predicated region
    $region30: #{tpu_custom_call.1} parent=1 // pred_check
      _
    $region31: #{tpu_custom_call.1} parent=1 // pred_check_branch
      %60 = sbr.rel (0) target = $region33
    $region32: #{tpu_custom_call.1} parent=1 // pred_region
      %61 = dma.done [#allocation3], 256
    $region33: #{tpu_custom_call.1} parent=1 // pred_fallthru
      _
    // Predicated region
    $region34: #{tpu_custom_call.1} parent=1 // pred_check
      _
    $region35: #{tpu_custom_call.1} parent=1 // pred_check_branch
      %63 = sbr.rel (0) target = $region37
    $region36: #{tpu_custom_call.1} parent=1 // pred_region
      %64 = dma.done [#allocation6], 512
    $region37: #{tpu_custom_call.1} parent=1 // pred_fallthru
      _
    // Predicated region
    $region38: #{tpu_custom_call.1} parent=1 // pred_check
      _
    $region39: #{tpu_custom_call.1} parent=1 // pred_check_branch
      %66 = sbr.rel (0) target = $region41
    $region40: #{tpu_custom_call.1} parent=1 // pred_region
      %67 = dma.done [#allocation6], 2048
    $region41: #{tpu_custom_call.1} parent=1 // pred_fallthru
      _
    %v68 = vld [vmem:[#allocation2] sm:$0xff]
    %v69 = vld [vmem:[#allocation2 + $0x8] sm:$0xff]
    %v70 = vld [vmem:[%s1] sm:$0x1]
    %v71 = vld [vmem:[%s2] sm:$0x1]
    %vm72 = vcmask 261120
    %v73 = vsel %vm72, %v68, 0.0
    %74 = vadd.xlane.f32.xlu0 %v73
    %v75 = vpop.xlane.xlu0 %74
    %v76 = vsel %vm72, %v69, 0.0
    %77 = vadd.xlane.f32.xlu0 %v76
    %v78 = vpop.xlane.xlu0 %77
    %v79 = vrcp.pop 32.0
    %v80 = vmul.f32 %v75, %v79
    %v81 = vmul.f32 %v78, %v79
    %v82 = vsub.f32 %v68, %v80
    %v83 = vsub.f32 %v69, %v81
    %v84 = vmul.f32 %v82, %v82
    %v85 = vmul.f32 %v83, %v83
    %v86 = vsel %vm72, %v84, 0.0
    %87 = vadd.xlane.f32.xlu0 %v86
    %v88 = vpop.xlane.xlu0 %87
    %v89 = vsel %vm72, %v85, 0.0
    %90 = vadd.xlane.f32.xlu0 %v89
    %v91 = vpop.xlane.xlu0 %90
    %v92 = vmul.f32 %v88, %v79
    %v93 = vmul.f32 %v91, %v79
    %v94 = vadd.f32 %v92, 1e-05
    %v95 = vadd.f32 %v93, 1e-05
    %v96 = vrsqrt.pop %v94
    %v97 = vrsqrt.pop %v95
    %v98 = vmul.f32 %v82, %v96
    %v99 = vmul.f32 %v83, %v97
    %v101 = vlaneseq
    %v102 = vshrl.u32 %v101, 7
    %v103 = vsub.s32 0, %v102
    %v104 = vrot.slane %v70, %v103
    %v106 = vmul.f32 %v98, %v104
    %v107 = vmul.f32 %v99, %v104
    %v109 = vlaneseq
    %v110 = vshrl.u32 %v109, 7
    %v111 = vsub.s32 0, %v110
    %v112 = vrot.slane %v71, %v111
    %v114 = vadd.f32 %v106, %v112
    %v115 = vadd.f32 %v107, %v112
    %v116 = vld [vmem:[#allocation5] sm:$0xff]
    %v117 = vld [vmem:[#allocation5 + $0x8] sm:$0xff]
    %v118 = vld [vmem:[#allocation5 + $0x10] sm:$0xff]
    %v119 = vld [vmem:[#allocation5 + $0x18] sm:$0xff]
    %v120 = vld [vmem:[%s4] sm:$0x1]
    %v122 = vlaneseq
    %v123 = vshrl.u32 %v122, 7
    %v124 = vsub.s32 0, %v123
    %v125 = vrot.slane %v120, %v124
    %v128 = vsel %vm72, %v114, 0
    %v131 = vsel %vm72, %v115, 0
    %133 = vmatprep.subr.mxu0 0.0
    %134 = vmatpush1.msra.mxu0 %v116
    %135 = vmatprep.subr.mxu0 0.0
    %136 = vmatpush1.msra.mxu0 %v117
    %137 = vmatprep.subr.mxu0 0.0
    %138 = vmatpush1.msra.mxu0 %v118
    %139 = vmatprep.subr.mxu0 0.0
    %140 = vmatpush1.msra.mxu0 %v119
    %141 = vmatprep.subr.mxu0 0.0
    %142 = vmatpush1.msra.mxu0 0.0
    %143 = vmatprep.subr.mxu0 0.0
    %144 = vmatpush1.msra.mxu0 0.0
    %145 = vmatprep.subr.mxu0 0.0
    %146 = vmatpush1.msra.mxu0 0.0
    %147 = vmatprep.subr.mxu0 0.0
    %148 = vmatpush1.msra.mxu0 0.0
    %149 = vmatprep.subr.mxu0 0.0
    %150 = vmatpush1.msra.mxu0 0.0
    %151 = vmatprep.subr.mxu0 0.0
    %152 = vmatpush1.msra.mxu0 0.0
    %153 = vmatprep.subr.mxu0 0.0
    %154 = vmatpush1.msra.mxu0 0.0
    %155 = vmatprep.subr.mxu0 0.0
    %156 = vmatpush1.msra.mxu0 0.0
    %157 = vmatprep.subr.mxu0 0.0
    %158 = vmatpush1.msra.mxu0 0.0
    %159 = vmatprep.subr.mxu0 0.0
    %160 = vmatpush1.msra.mxu0 0.0
    %161 = vmatprep.subr.mxu0 0.0
    %162 = vmatpush1.msra.mxu0 0.0
    %163 = vmatprep.subr.mxu0 0.0
    %164 = vmatpush1.msra.mxu0 0.0
    %165 = vmatprep.subr.mxu0 0.0
    %166 = vmatpush1.msra.mxu0 0.0
    %167 = vmatprep.subr.mxu0 0.0
    %168 = vmatpush1.msra.mxu0 0.0
    %169 = vmatprep.subr.mxu0 0.0
    %170 = vmatpush1.msra.mxu0 0.0
    %171 = vmatprep.subr.mxu0 0.0
    %172 = vmatpush1.msra.mxu0 0.0
    %173 = vmatprep.subr.mxu0 0.0
    %174 = vmatpush1.msra.mxu0 0.0
    %175 = vmatprep.subr.mxu0 0.0
    %176 = vmatpush1.msra.mxu0 0.0
    %177 = vmatprep.subr.mxu0 0.0
    %178 = vmatpush1.msra.mxu0 0.0
    %179 = vmatprep.subr.mxu0 0.0
    %180 = vmatpush1.msra.mxu0 0.0
    %181 = vmatprep.subr.mxu0 0.0
    %182 = vmatpush1.msra.mxu0 0.0
    %183 = vmatprep.subr.mxu0 0.0
    %184 = vmatpush1.msra.mxu0 0.0
    %185 = vmatprep.subr.mxu0 0.0
    %186 = vmatpush1.msra.mxu0 0.0
    %187 = vmatprep.subr.mxu0 0.0
    %188 = vmatpush1.msra.mxu0 0.0
    %189 = vmatprep.subr.mxu0 0.0
    %190 = vmatpush1.msra.mxu0 0.0
    %191 = vmatprep.subr.mxu0 0.0
    %192 = vmatpush1.msra.mxu0 0.0
    %193 = vmatprep.subr.mxu0 0.0
    %194 = vmatpush1.msra.mxu0 0.0
    %195 = vmatprep.subr.mxu0 0.0
    %196 = vmatpush1.msra.mxu0 0.0
    %197 = vmatprep.mubr.f32.mxu0 0.0
    %198 = vmatmul.mubr.f32.gmra.mrb[0].mxu0 %v128
    %v199 = vpop.f32.mrb[0].mxu0
    %v200 = vadd.f32 %v125, %v199
    %v201 = vpop.f32.mrb[0].mxu0
    %202 = vmatprep.mubr.f32.mxu0 0.0
    %203 = vmatmul.mubr.f32.gmra.mrb[0].mxu0 %v131
    %v204 = vpop.f32.mrb[0].mxu0
    %v205 = vadd.f32 %v125, %v204
    %v206 = vpop.f32.mrb[0].mxu0
    %207 = vdwg.mxu0
    %v208 = vmul.f32 %v200, 0.5
    %v209 = vmul.f32 %v205, 0.5
    %v210 = vmul.f32 %v200, 0.70710677
    %v211 = vmul.f32 %v205, 0.70710677
    %v212 = verf.f32.pop %v210
    %v213 = verf.f32.pop %v211
    %v214 = vadd.f32 %v212, 1.0
    %v215 = vadd.f32 %v213, 1.0
    %v216 = vmul.f32 %v208, %v214
    %v217 = vmul.f32 %v209, %v215
    %v218 = vld [vmem:[#allocation7] sm:$0xff]
    %v219 = vld [vmem:[#allocation7 + $0x8] sm:$0xff]
    %v220 = vld [vmem:[#allocation7 + $0x10] sm:$0xff]
    %v221 = vld [vmem:[#allocation7 + $0x18] sm:$0xff]
    %v222 = vld [vmem:[#allocation7 + $0x20] sm:$0xff]
    %v223 = vld [vmem:[#allocation7 + $0x28] sm:$0xff]
    %v224 = vld [vmem:[#allocation7 + $0x30] sm:$0xff]
    %v225 = vld [vmem:[#allocation7 + $0x38] sm:$0xff]
    %v226 = vld [vmem:[#allocation7 + $0x40] sm:$0xff]
    %v227 = vld [vmem:[#allocation7 + $0x48] sm:$0xff]
    %v228 = vld [vmem:[#allocation7 + $0x50] sm:$0xff]
    %v229 = vld [vmem:[#allocation7 + $0x58] sm:$0xff]
    %v230 = vld [vmem:[#allocation7 + $0x60] sm:$0xff]
    %v231 = vld [vmem:[#allocation7 + $0x68] sm:$0xff]
    %v232 = vld [vmem:[#allocation7 + $0x70] sm:$0xff]
    %v233 = vld [vmem:[#allocation7 + $0x78] sm:$0xff]
    %v234 = vld [vmem:[%s6] sm:$0x1]
    %v236 = vlaneseq
    %v237 = vshrl.u32 %v236, 7
    %v238 = vsub.s32 0, %v237
    %v239 = vrot.slane %v234, %v238
    %241 = vmatprep.subr.mxu0 0.0
    %242 = vmatpush1.msra.mxu0 %v218
    %243 = vmatprep.subr.mxu0 0.0
    %244 = vmatpush1.msra.mxu0 %v219
    %245 = vmatprep.subr.mxu0 0.0
    %246 = vmatpush1.msra.mxu0 %v220
    %247 = vmatprep.subr.mxu0 0.0
    %248 = vmatpush1.msra.mxu0 %v221
    %249 = vmatprep.subr.mxu0 0.0
    %250 = vmatpush1.msra.mxu0 %v222
    %251 = vmatprep.subr.mxu0 0.0
    %252 = vmatpush1.msra.mxu0 %v223
    %253 = vmatprep.subr.mxu0 0.0
    %254 = vmatpush1.msra.mxu0 %v224
    %255 = vmatprep.subr.mxu0 0.0
    %256 = vmatpush1.msra.mxu0 %v225
    %257 = vmatprep.subr.mxu0 0.0
    %258 = vmatpush1.msra.mxu0 %v226
    %259 = vmatprep.subr.mxu0 0.0
    %260 = vmatpush1.msra.mxu0 %v227
    %261 = vmatprep.subr.mxu0 0.0
    %262 = vmatpush1.msra.mxu0 %v228
    %263 = vmatprep.subr.mxu0 0.0
    %264 = vmatpush1.msra.mxu0 %v229
    %265 = vmatprep.subr.mxu0 0.0
    %266 = vmatpush1.msra.mxu0 %v230
    %267 = vmatprep.subr.mxu0 0.0
    %268 = vmatpush1.msra.mxu0 %v231
    %269 = vmatprep.subr.mxu0 0.0
    %270 = vmatpush1.msra.mxu0 %v232
    %271 = vmatprep.subr.mxu0 0.0
    %272 = vmatpush1.msra.mxu0 %v233
    %273 = vmatprep.subr.mxu0 0.0
    %274 = vmatpush1.msra.mxu0 0.0
    %275 = vmatprep.subr.mxu0 0.0
    %276 = vmatpush1.msra.mxu0 0.0
    %277 = vmatprep.subr.mxu0 0.0
    %278 = vmatpush1.msra.mxu0 0.0
    %279 = vmatprep.subr.mxu0 0.0
    %280 = vmatpush1.msra.mxu0 0.0
    %281 = vmatprep.subr.mxu0 0.0
    %282 = vmatpush1.msra.mxu0 0.0
    %283 = vmatprep.subr.mxu0 0.0
    %284 = vmatpush1.msra.mxu0 0.0
    %285 = vmatprep.subr.mxu0 0.0
    %286 = vmatpush1.msra.mxu0 0.0
    %287 = vmatprep.subr.mxu0 0.0
    %288 = vmatpush1.msra.mxu0 0.0
    %289 = vmatprep.subr.mxu0 0.0
    %290 = vmatpush1.msra.mxu0 0.0
    %291 = vmatprep.subr.mxu0 0.0
    %292 = vmatpush1.msra.mxu0 0.0
    %293 = vmatprep.subr.mxu0 0.0
    %294 = vmatpush1.msra.mxu0 0.0
    %295 = vmatprep.subr.mxu0 0.0
    %296 = vmatpush1.msra.mxu0 0.0
    %297 = vmatprep.subr.mxu0 0.0
    %298 = vmatpush1.msra.mxu0 0.0
    %299 = vmatprep.subr.mxu0 0.0
    %300 = vmatpush1.msra.mxu0 0.0
    %301 = vmatprep.subr.mxu0 0.0
    %302 = vmatpush1.msra.mxu0 0.0
    %303 = vmatprep.subr.mxu0 0.0
    %304 = vmatpush1.msra.mxu0 0.0
    %305 = vmatprep.mubr.f32.mxu0 0.0
    %306 = vmatmul.mubr.f32.gmra.mrb[0].mxu0 %v216
    %v307 = vpop.f32.mrb[0].mxu0
    %v308 = vadd.f32 %v239, %v307
    %v309 = vpop.f32.mrb[0].mxu0
    %310 = vmatprep.mubr.f32.mxu0 0.0
    %311 = vmatmul.mubr.f32.gmra.mrb[0].mxu0 %v217
    %v312 = vpop.f32.mrb[0].mxu0
    %v313 = vadd.f32 %v239, %v312
    %v314 = vpop.f32.mrb[0].mxu0
    %315 = vdwg.mxu0
    %316 = vst [vmem:[#allocation8] sm:$0xff] %v308
    %317 = vst [vmem:[#allocation8 + $0x8] sm:$0xff] %v313
    // Predicated region
    $region42: #{tpu_custom_call.1} parent=1 // pred_check
      _
    $region43: #{tpu_custom_call.1} parent=1 // pred_check_branch
      %319 = sbr.rel (0) target = $region45
    $region44: #{tpu_custom_call.1} parent=1 // pred_region
      %s321 = ssub.s32 256, 256
      %322 = vsyncadd [#allocation4], %s321
      %s323 = sshll.u32 [#allocation8], 4
      %s324 = int_to_ptr.vmem [resolvable:$true] %s323
      %329 = dma.vmem_to_hbm [thread:$0]  %s324, 256, %s7, [#allocation4], 128, 128, 8
    $region45: #{tpu_custom_call.1} parent=1 // pred_fallthru
      _
    // Predicated region
    $region46: #{tpu_custom_call.1} parent=1 // pred_check
      _
    $region47: #{tpu_custom_call.1} parent=1 // pred_check_branch
      %331 = sbr.rel (0) target = $region49
    $region48: #{tpu_custom_call.1} parent=1 // pred_region
      %332 = dma.done [#allocation4], 256
    $region49: #{tpu_custom_call.1} parent=1 // pred_fallthru
      _
    %333 = vsyncpa [#allocation3], 1
    %334 = vsyncpa [#allocation6], 1
    %335 = vsyncpa [#allocation4], 1

</llo_original>
